<compile_context>
chip_gen: v7x
topology: tpu7x:2x2x1
jax: 0.10.0
libtpu: 0.0.40
codegen_flags: <defaults>
</compile_context>

<pallas_src>
import functools

import jax
import jax.numpy as jnp
from jax.experimental import pallas as pl
from jax.experimental.pallas import tpu as pltpu


def mlp_kernel(x_ref, w1_ref, b1_ref, w2_ref, b2_ref, w3_ref, b3_ref,
               w4_ref, b4_ref, o_ref, *, elem_dtype, approx_sigmoid):
    """Whole MLP on one row tile. MXU accumulates in f32; bias-add/ReLU run in
    `elem_dtype` (f32 on the f32 path, bf16 on the bf16 path)."""

    def layer(h, w_ref, b_ref):
        acc = jnp.dot(h.astype(w_ref.dtype), w_ref[...],
                      preferred_element_type=jnp.float32)
        return jnp.maximum(acc.astype(elem_dtype) + b_ref[...].astype(elem_dtype), 0)

    h = layer(x_ref[...], w1_ref, b1_ref)
    h = layer(h, w2_ref, b2_ref)
    h = layer(h, w3_ref, b3_ref)

    # Final layer: Linear + Sigmoid. exp runs on the EUP; reciprocal also lands
    # on the EUP when approx_sigmoid=True, otherwise exact divide (1e-5 check).
    z = jnp.dot(h.astype(w4_ref.dtype), w4_ref[...],
                preferred_element_type=jnp.float32)
    z = z + b4_ref[...].astype(jnp.float32)
    o_ref[...] = pl.reciprocal(1.0 + jnp.exp(-z),
                               approx=approx_sigmoid).astype(o_ref.dtype)


def _round_up(n, m):
    return ((n + m - 1) // m) * m


@functools.partial(jax.jit, static_argnames=("tm", "approx_sigmoid", "out_dtype"))
def mlp_forward(x, params, *, tm=512, approx_sigmoid=False, out_dtype=jnp.float32):
    """params = (w1, b1, w2, b2, w3, b3, w4, b4); weights stored [in, out],
    biases stored [1, out].  Params may be f32 or bf16 (bf16 => bf16
    elementwise chain; accumulation always f32)."""
    B, in_dim = x.shape
    out_dim = params[-1].shape[-1]

    # Row-tile choice: multiple of 8 (sublane constraint), capped at `tm`
    # (vreg-pressure cap); for large B split into an even number of tiles so
    # the parallel axis can use both TensorCores on v7x.
    tm = _round_up(max(int(tm), 8), 8)
    if B <= tm:
        tile_m = _round_up(B, 8)                       # single (possibly partial) tile
    else:
        n_tiles = 2 * pl.cdiv(B, 2 * tm)               # even tile count
        tile_m = _round_up(pl.cdiv(B, n_tiles), 8)
    grid = (pl.cdiv(B, tile_m),)

    # Elementwise dtype follows the weight storage dtype (bf16 on v6e/v7x
    # deployment path, f32 otherwise).
    w_dtype = params[0].dtype
    elem_dtype = jnp.bfloat16 if w_dtype == jnp.bfloat16 else jnp.float32

    # x / out tiled over the batch axis; all weights & biases VMEM-resident
    # (constant block index (0, 0) -- no closure over loop variables).
    in_specs = [pl.BlockSpec((tile_m, in_dim), lambda i: (i, 0))]
    for p in params:
        assert p.ndim == 2, "params must be rank-2 ([in,out] weights, [1,out] biases)"
        in_specs.append(pl.BlockSpec(p.shape, lambda i: (0, 0)))

    kernel = functools.partial(mlp_kernel, elem_dtype=elem_dtype,
                               approx_sigmoid=approx_sigmoid)

    return pl.pallas_call(
        kernel,
        out_shape=jax.ShapeDtypeStruct((B, out_dim), out_dtype),
        grid=grid,
        in_specs=in_specs,
        out_specs=pl.BlockSpec((tile_m, out_dim), lambda i: (i, 0)),
        compiler_params=pltpu.CompilerParams(
            dimension_semantics=("parallel",)),        # megacore on v7x
    )(x, *params)


def init_params(key, in_dim, hidden_1, hidden_2, hidden_3, out_dim):
    """Deterministic init mimicking nn.Linear default (uniform +-1/sqrt(fan_in)).
    Weights stored [in, out] (transposed vs PyTorch) so the kernel does x @ W."""
    dims = [(in_dim, hidden_1), (hidden_1, hidden_2),
            (hidden_2, hidden_3), (hidden_3, out_dim)]
    params = []
    for fan_in, fan_out in dims:
        key, kw, kb = jax.random.split(key, 3)
        bound = 1.0 / (fan_in ** 0.5)
        w = jax.random.uniform(kw, (fan_in, fan_out), jnp.float32, -bound, bound)
        b = jax.random.uniform(kb, (1, fan_out), jnp.float32, -bound, bound)
        params += [w, b]
    return tuple(params)


def reference_forward(x, params):
    w1, b1, w2, b2, w3, b3, w4, b4 = [p.astype(jnp.float32) for p in params]
    h = x.astype(jnp.float32)
    h = jnp.maximum(h @ w1 + b1, 0.0)
    h = jnp.maximum(h @ w2 + b2, 0.0)
    h = jnp.maximum(h @ w3 + b3, 0.0)
    return jax.nn.sigmoid(h @ w4 + b4)


if __name__ == "__main__":
    # Config: in_dim=32, hidden_1=64, hidden_2=64, hidden_3=32, out_dim=16
    B, in_dim, h1, h2, h3, out_dim = 8, 32, 64, 64, 32, 16

    key = jax.random.PRNGKey(0)
    key, kx = jax.random.split(key)
    x = jax.random.normal(kx, (B, in_dim), jnp.float32)
    params = init_params(key, in_dim, h1, h2, h3, out_dim)

    # 1) Small batch, f32 path, exact sigmoid -- tight check vs pure-JAX ref.
    out = jax.block_until_ready(mlp_forward(x, params))
    ref = reference_forward(x, params)
    assert out.shape == (B, out_dim)
    assert jnp.allclose(out, ref, atol=1e-5, rtol=1e-5), "f32 mismatch vs reference"

    # 2) Larger ragged batch: bf16 params + bf16 x + bf16 output + approx
    #    sigmoid; exercises the partial last block and the even >=2 grid
    #    (recommended v6e/v7x deployment configuration).
    B2 = 1337  # not a tile multiple -> exercises the un-padded partial block
    key, kx2 = jax.random.split(key)
    x2 = jax.random.normal(kx2, (B2, in_dim), jnp.bfloat16)
    params_bf16 = tuple(p.astype(jnp.bfloat16) for p in params)
    out2 = jax.block_until_ready(
        mlp_forward(x2, params_bf16, approx_sigmoid=True, out_dtype=jnp.bfloat16))
    ref2 = reference_forward(x2, params)
    assert out2.shape == (B2, out_dim)
    assert jnp.allclose(out2.astype(jnp.float32), ref2, atol=5e-2), \
        "bf16 mismatch vs reference"

    print("KERNEL_OK")
</pallas_src>

<mosaic_0001>
module attributes {stable_mosaic.version = 11 : i64} {
  func.func @mlp_kernel(%arg0: i32, %arg1: memref<8x32xf32, #tpu.memory_space<vmem>>, %arg2: memref<32x64xf32, #tpu.memory_space<vmem>>, %arg3: memref<1x64xf32, #tpu.memory_space<vmem>>, %arg4: memref<64x64xf32, #tpu.memory_space<vmem>>, %arg5: memref<1x64xf32, #tpu.memory_space<vmem>>, %arg6: memref<64x32xf32, #tpu.memory_space<vmem>>, %arg7: memref<1x32xf32, #tpu.memory_space<vmem>>, %arg8: memref<32x16xf32, #tpu.memory_space<vmem>>, %arg9: memref<1x16xf32, #tpu.memory_space<vmem>>, %arg10: memref<8x16xf32, #tpu.memory_space<vmem>>) attributes {dimension_semantics = [#tpu.dimension_semantics<parallel>], iteration_bounds = array<i64: 1>, scalar_prefetch = 0 : i64, scratch_operands = 0 : i64, tpu.core_type = #tpu.core_type<tc>, window_params = [{transform_indices = @transform_0, window_bounds = array<i64: 8, 32>}, {pipeline_mode = #tpu.pipeline_mode<synchronous>, transform_indices = @transform_1, window_bounds = array<i64: 32, 64>}, {pipeline_mode = #tpu.pipeline_mode<synchronous>, transform_indices = @transform_2, window_bounds = array<i64: 1, 64>}, {pipeline_mode = #tpu.pipeline_mode<synchronous>, transform_indices = @transform_3, window_bounds = array<i64: 64, 64>}, {pipeline_mode = #tpu.pipeline_mode<synchronous>, transform_indices = @transform_4, window_bounds = array<i64: 1, 64>}, {pipeline_mode = #tpu.pipeline_mode<synchronous>, transform_indices = @transform_5, window_bounds = array<i64: 64, 32>}, {pipeline_mode = #tpu.pipeline_mode<synchronous>, transform_indices = @transform_6, window_bounds = array<i64: 1, 32>}, {pipeline_mode = #tpu.pipeline_mode<synchronous>, transform_indices = @transform_7, window_bounds = array<i64: 32, 16>}, {pipeline_mode = #tpu.pipeline_mode<synchronous>, transform_indices = @transform_8, window_bounds = array<i64: 1, 16>}, {transform_indices = @transform_9, window_bounds = array<i64: 8, 16>}]} {
    %c0 = arith.constant 0 : index
    %c0_0 = arith.constant 0 : index
    %0 = vector.load %arg1[%c0, %c0_0] : memref<8x32xf32, #tpu.memory_space<vmem>>, vector<8x32xf32>
    %c0_1 = arith.constant 0 : index
    %c0_2 = arith.constant 0 : index
    %1 = vector.load %arg2[%c0_1, %c0_2] : memref<32x64xf32, #tpu.memory_space<vmem>>, vector<32x64xf32>
    %cst = arith.constant dense<0.000000e+00> : vector<8x64xf32>
    %2 = tpu.matmul %0, %1, %cst {dimension_numbers = #tpu.dot_dimension_numbers<[1], [0], [0], [1], [0, 0, 1, 1], [], []>} : vector<8x32xf32>, vector<32x64xf32>, vector<8x64xf32> -> vector<8x64xf32>
    %c0_3 = arith.constant 0 : index
    %c0_4 = arith.constant 0 : index
    %3 = vector.load %arg3[%c0_3, %c0_4] : memref<1x64xf32, #tpu.memory_space<vmem>>, vector<1x64xf32>
    %4 = vector.broadcast %3 : vector<1x64xf32> to vector<8x64xf32>
    %5 = arith.addf %2, %4 : vector<8x64xf32>
    %cst_5 = arith.constant 0.000000e+00 : f32
    %6 = vector.broadcast %cst_5 : f32 to vector<8x64xf32>
    %7 = arith.maximumf %5, %6 : vector<8x64xf32>
    %c0_6 = arith.constant 0 : index
    %c0_7 = arith.constant 0 : index
    %8 = vector.load %arg4[%c0_6, %c0_7] : memref<64x64xf32, #tpu.memory_space<vmem>>, vector<64x64xf32>
    %cst_8 = arith.constant dense<0.000000e+00> : vector<8x64xf32>
    %9 = tpu.matmul %7, %8, %cst_8 {dimension_numbers = #tpu.dot_dimension_numbers<[1], [0], [0], [1], [0, 0, 1, 1], [], []>} : vector<8x64xf32>, vector<64x64xf32>, vector<8x64xf32> -> vector<8x64xf32>
    %c0_9 = arith.constant 0 : index
    %c0_10 = arith.constant 0 : index
    %10 = vector.load %arg5[%c0_9, %c0_10] : memref<1x64xf32, #tpu.memory_space<vmem>>, vector<1x64xf32>
    %11 = vector.broadcast %10 : vector<1x64xf32> to vector<8x64xf32>
    %12 = arith.addf %9, %11 : vector<8x64xf32>
    %cst_11 = arith.constant 0.000000e+00 : f32
    %13 = vector.broadcast %cst_11 : f32 to vector<8x64xf32>
    %14 = arith.maximumf %12, %13 : vector<8x64xf32>
    %c0_12 = arith.constant 0 : index
    %c0_13 = arith.constant 0 : index
    %15 = vector.load %arg6[%c0_12, %c0_13] : memref<64x32xf32, #tpu.memory_space<vmem>>, vector<64x32xf32>
    %cst_14 = arith.constant dense<0.000000e+00> : vector<8x32xf32>
    %16 = tpu.matmul %14, %15, %cst_14 {dimension_numbers = #tpu.dot_dimension_numbers<[1], [0], [0], [1], [0, 0, 1, 1], [], []>} : vector<8x64xf32>, vector<64x32xf32>, vector<8x32xf32> -> vector<8x32xf32>
    %c0_15 = arith.constant 0 : index
    %c0_16 = arith.constant 0 : index
    %17 = vector.load %arg7[%c0_15, %c0_16] : memref<1x32xf32, #tpu.memory_space<vmem>>, vector<1x32xf32>
    %18 = vector.broadcast %17 : vector<1x32xf32> to vector<8x32xf32>
    %19 = arith.addf %16, %18 : vector<8x32xf32>
    %cst_17 = arith.constant 0.000000e+00 : f32
    %20 = vector.broadcast %cst_17 : f32 to vector<8x32xf32>
    %21 = arith.maximumf %19, %20 : vector<8x32xf32>
    %c0_18 = arith.constant 0 : index
    %c0_19 = arith.constant 0 : index
    %22 = vector.load %arg8[%c0_18, %c0_19] : memref<32x16xf32, #tpu.memory_space<vmem>>, vector<32x16xf32>
    %cst_20 = arith.constant dense<0.000000e+00> : vector<8x16xf32>
    %23 = tpu.matmul %21, %22, %cst_20 {dimension_numbers = #tpu.dot_dimension_numbers<[1], [0], [0], [1], [0, 0, 1, 1], [], []>} : vector<8x32xf32>, vector<32x16xf32>, vector<8x16xf32> -> vector<8x16xf32>
    %c0_21 = arith.constant 0 : index
    %c0_22 = arith.constant 0 : index
    %24 = vector.load %arg9[%c0_21, %c0_22] : memref<1x16xf32, #tpu.memory_space<vmem>>, vector<1x16xf32>
    %25 = vector.broadcast %24 : vector<1x16xf32> to vector<8x16xf32>
    %26 = arith.addf %23, %25 : vector<8x16xf32>
    %cst_23 = arith.constant 0.000000e+00 : f32
    %27 = vector.broadcast %cst_23 : f32 to vector<8x16xf32>
    %28 = arith.subf %27, %26 : vector<8x16xf32>
    %29 = math.exp %28 : vector<8x16xf32>
    %cst_24 = arith.constant 1.000000e+00 : f32
    %30 = vector.broadcast %cst_24 : f32 to vector<8x16xf32>
    %31 = arith.addf %30, %29 : vector<8x16xf32>
    %32 = tpu.reciprocal %31 : vector<8x16xf32> -> vector<8x16xf32>
    %c0_25 = arith.constant 0 : index
    %c0_26 = arith.constant 0 : index
    %33 = vector.load %arg10[%c0_25, %c0_26] : memref<8x16xf32, #tpu.memory_space<vmem>>, vector<8x16xf32>
    tpu.vector_store %arg10[%c0_25, %c0_26], %32 {strides = array<i32>} : memref<8x16xf32, #tpu.memory_space<vmem>>, vector<8x16xf32>,
    return
  }
  func.func @transform_0(%arg0: i32) -> (i32, i32) {
    %c0_i32 = arith.constant 0 : i32
    %c0_i32_0 = arith.constant 0 : i32
    return %arg0, %c0_i32 : i32, i32
  }
  func.func @transform_1(%arg0: i32) -> (i32, i32) {
    %c0_i32 = arith.constant 0 : i32
    %c0_i32_0 = arith.constant 0 : i32
    %c0_i32_1 = arith.constant 0 : i32
    return %c0_i32, %c0_i32_0 : i32, i32
  }
  func.func @transform_2(%arg0: i32) -> (i32, i32) {
    %c0_i32 = arith.constant 0 : i32
    %c0_i32_0 = arith.constant 0 : i32
    %c0_i32_1 = arith.constant 0 : i32
    return %c0_i32, %c0_i32_0 : i32, i32
  }
  func.func @transform_3(%arg0: i32) -> (i32, i32) {
    %c0_i32 = arith.constant 0 : i32
    %c0_i32_0 = arith.constant 0 : i32
    %c0_i32_1 = arith.constant 0 : i32
    return %c0_i32, %c0_i32_0 : i32, i32
  }
  func.func @transform_4(%arg0: i32) -> (i32, i32) {
    %c0_i32 = arith.constant 0 : i32
    %c0_i32_0 = arith.constant 0 : i32
    %c0_i32_1 = arith.constant 0 : i32
    return %c0_i32, %c0_i32_0 : i32, i32
  }
  func.func @transform_5(%arg0: i32) -> (i32, i32) {
    %c0_i32 = arith.constant 0 : i32
    %c0_i32_0 = arith.constant 0 : i32
    %c0_i32_1 = arith.constant 0 : i32
    return %c0_i32, %c0_i32_0 : i32, i32
  }
  func.func @transform_6(%arg0: i32) -> (i32, i32) {
    %c0_i32 = arith.constant 0 : i32
    %c0_i32_0 = arith.constant 0 : i32
    %c0_i32_1 = arith.constant 0 : i32
    return %c0_i32, %c0_i32_0 : i32, i32
  }
  func.func @transform_7(%arg0: i32) -> (i32, i32) {
    %c0_i32 = arith.constant 0 : i32
    %c0_i32_0 = arith.constant 0 : i32
    %c0_i32_1 = arith.constant 0 : i32
    return %c0_i32, %c0_i32_0 : i32, i32
  }
  func.func @transform_8(%arg0: i32) -> (i32, i32) {
    %c0_i32 = arith.constant 0 : i32
    %c0_i32_0 = arith.constant 0 : i32
    %c0_i32_1 = arith.constant 0 : i32
    return %c0_i32, %c0_i32_0 : i32, i32
  }
  func.func @transform_9(%arg0: i32) -> (i32, i32) {
    %c0_i32 = arith.constant 0 : i32
    %c0_i32_0 = arith.constant 0 : i32
    return %arg0, %c0_i32 : i32, i32
  }
}

</mosaic_0001>

<llo_original>
// kernel: mlp_forward.1
$region0: #{mlp_forward.1}
  #allocation0 [shape = 'u32[]', space=smem, size = 0x4, offset = 0x4, fixed_abs, tag = 'smem constant byte address 0x4 - core index']
  #allocation1 [shape = 'u32[144,128]{1,0:T(1,128)}', space=vmem, size = 0x12000, scoped, tag = 'internal scratch']
  %s0 = inlined_call_operand.vmem [shape: f32[8,32], index: 0, kind: input, shape index: {}]
  %s1 = inlined_call_operand.vmem [shape: f32[32,64], index: 1, kind: input, shape index: {}]
  %s2 = inlined_call_operand.vmem [shape: f32[1,64], index: 2, kind: input, shape index: {}]
  %s3 = inlined_call_operand.vmem [shape: f32[64,64], index: 3, kind: input, shape index: {}]
  %s4 = inlined_call_operand.vmem [shape: f32[1,64], index: 4, kind: input, shape index: {}]
  %s5 = inlined_call_operand.vmem [shape: f32[64,32], index: 5, kind: input, shape index: {}]
  %s6 = inlined_call_operand.vmem [shape: f32[1,32], index: 6, kind: input, shape index: {}]
  %s7 = inlined_call_operand.vmem [shape: f32[32,16], index: 7, kind: input, shape index: {}]
  %s8 = inlined_call_operand.vmem [shape: f32[1,16], index: 8, kind: input, shape index: {}]
  %s9 = inlined_call_operand.hbm [shape: f32[8,16], index: 9, kind: output, shape index: {}]
  %s10 = sld [smem:[#allocation0]]
  $region46: #{mlp_forward.1} parent=0
    _
  %s12 = ssub.s32 1, %s10
  %s13 = scalar_select 0, %s12, %s10
  $region1: #{mlp_forward.1} parent=0
    #allocation2 [shape = 'u8[4096]{0}', space=vmem, size = 0x1000, scoped, tag = 'output window, operand 0, single buffered']
    #allocation3 [shape = 's32[1]{0}', space=sflag, size = 0x4, scoped, tag = 'scoped memory for mlp_forward.1']
    %14 = vsyncpa [#allocation3], 0
    // Predicated region
    $region2: #{mlp_forward.1} parent=1 // pred_check
      _
    $region3: #{mlp_forward.1} parent=1 // pred_check_branch
      %16 = sbr.rel (0) target = $region5
    $region4: #{mlp_forward.1} parent=1 // pred_region
      _
    $region5: #{mlp_forward.1} parent=1 // pred_fallthru
      _
    // Predicated region
    $region6: #{mlp_forward.1} parent=1 // pred_check
      _
    $region7: #{mlp_forward.1} parent=1 // pred_check_branch
      %18 = sbr.rel (0) target = $region9
    $region8: #{mlp_forward.1} parent=1 // pred_region
      _
    $region9: #{mlp_forward.1} parent=1 // pred_fallthru
      _
    // Predicated region
    $region10: #{mlp_forward.1} parent=1 // pred_check
      _
    $region11: #{mlp_forward.1} parent=1 // pred_check_branch
      %20 = sbr.rel (0) target = $region13
    $region12: #{mlp_forward.1} parent=1 // pred_region
      _
    $region13: #{mlp_forward.1} parent=1 // pred_fallthru
      _
    // Predicated region
    $region14: #{mlp_forward.1} parent=1 // pred_check
      _
    $region15: #{mlp_forward.1} parent=1 // pred_check_branch
      %22 = sbr.rel (0) target = $region17
    $region16: #{mlp_forward.1} parent=1 // pred_region
      _
    $region17: #{mlp_forward.1} parent=1 // pred_fallthru
      _
    // Predicated region
    $region18: #{mlp_forward.1} parent=1 // pred_check
      _
    $region19: #{mlp_forward.1} parent=1 // pred_check_branch
      %24 = sbr.rel (0) target = $region21
    $region20: #{mlp_forward.1} parent=1 // pred_region
      _
    $region21: #{mlp_forward.1} parent=1 // pred_fallthru
      _
    // Predicated region
    $region22: #{mlp_forward.1} parent=1 // pred_check
      _
    $region23: #{mlp_forward.1} parent=1 // pred_check_branch
      %26 = sbr.rel (0) target = $region25
    $region24: #{mlp_forward.1} parent=1 // pred_region
      _
    $region25: #{mlp_forward.1} parent=1 // pred_fallthru
      _
    // Predicated region
    $region26: #{mlp_forward.1} parent=1 // pred_check
      _
    $region27: #{mlp_forward.1} parent=1 // pred_check_branch
      %28 = sbr.rel (0) target = $region29
    $region28: #{mlp_forward.1} parent=1 // pred_region
      _
    $region29: #{mlp_forward.1} parent=1 // pred_fallthru
      _
    // Predicated region
    $region30: #{mlp_forward.1} parent=1 // pred_check
      _
    $region31: #{mlp_forward.1} parent=1 // pred_check_branch
      %30 = sbr.rel (0) target = $region33
    $region32: #{mlp_forward.1} parent=1 // pred_region
      _
    $region33: #{mlp_forward.1} parent=1 // pred_fallthru
      _
    // Predicated region
    $region34: #{mlp_forward.1} parent=1 // pred_check
      _
    $region35: #{mlp_forward.1} parent=1 // pred_check_branch
      %32 = sbr.rel (0) target = $region37
    $region36: #{mlp_forward.1} parent=1 // pred_region
      _
    $region37: #{mlp_forward.1} parent=1 // pred_fallthru
      _
    %v33 = vld [vmem:[%s0] sm:$0xff]
    %v34 = vld [vmem:[%s1] sm:$0xff]
    %v35 = vld [vmem:[%s1 + $0x8] sm:$0xff]
    %v36 = vld [vmem:[%s1 + $0x10] sm:$0xff]
    %v37 = vld [vmem:[%s1 + $0x18] sm:$0xff]
    %v38 = vld [vmem:[%s2] sm:$0x1]
    %v40 = vlaneseq
    %v41 = vshrl.u32 %v40, 7
    %v42 = vsub.s32 0, %v41
    %v43 = vrot.slane %v38, %v42
    %vm45 = vcmask 261120
    %v47 = vsel %vm45, %v33, 0
    %49 = vmatprep.subr.mxu0 0.0
    %50 = vmatpush1.msra.mxu0 %v34
    %51 = vmatprep.subr.mxu0 0.0
    %52 = vmatpush1.msra.mxu0 %v35
    %53 = vmatprep.subr.mxu0 0.0
    %54 = vmatpush1.msra.mxu0 %v36
    %55 = vmatprep.subr.mxu0 0.0
    %56 = vmatpush1.msra.mxu0 %v37
    %57 = vmatprep.subr.mxu0 0.0
    %58 = vmatpush1.msra.mxu0 0.0
    %59 = vmatprep.subr.mxu0 0.0
    %60 = vmatpush1.msra.mxu0 0.0
    %61 = vmatprep.subr.mxu0 0.0
    %62 = vmatpush1.msra.mxu0 0.0
    %63 = vmatprep.subr.mxu0 0.0
    %64 = vmatpush1.msra.mxu0 0.0
    %65 = vmatprep.subr.mxu0 0.0
    %66 = vmatpush1.msra.mxu0 0.0
    %67 = vmatprep.subr.mxu0 0.0
    %68 = vmatpush1.msra.mxu0 0.0
    %69 = vmatprep.subr.mxu0 0.0
    %70 = vmatpush1.msra.mxu0 0.0
    %71 = vmatprep.subr.mxu0 0.0
    %72 = vmatpush1.msra.mxu0 0.0
    %73 = vmatprep.subr.mxu0 0.0
    %74 = vmatpush1.msra.mxu0 0.0
    %75 = vmatprep.subr.mxu0 0.0
    %76 = vmatpush1.msra.mxu0 0.0
    %77 = vmatprep.subr.mxu0 0.0
    %78 = vmatpush1.msra.mxu0 0.0
    %79 = vmatprep.subr.mxu0 0.0
    %80 = vmatpush1.msra.mxu0 0.0
    %81 = vmatprep.subr.mxu0 0.0
    %82 = vmatpush1.msra.mxu0 0.0
    %83 = vmatprep.subr.mxu0 0.0
    %84 = vmatpush1.msra.mxu0 0.0
    %85 = vmatprep.subr.mxu0 0.0
    %86 = vmatpush1.msra.mxu0 0.0
    %87 = vmatprep.subr.mxu0 0.0
    %88 = vmatpush1.msra.mxu0 0.0
    %89 = vmatprep.subr.mxu0 0.0
    %90 = vmatpush1.msra.mxu0 0.0
    %91 = vmatprep.subr.mxu0 0.0
    %92 = vmatpush1.msra.mxu0 0.0
    %93 = vmatprep.subr.mxu0 0.0
    %94 = vmatpush1.msra.mxu0 0.0
    %95 = vmatprep.subr.mxu0 0.0
    %96 = vmatpush1.msra.mxu0 0.0
    %97 = vmatprep.subr.mxu0 0.0
    %98 = vmatpush1.msra.mxu0 0.0
    %99 = vmatprep.subr.mxu0 0.0
    %100 = vmatpush1.msra.mxu0 0.0
    %101 = vmatprep.subr.mxu0 0.0
    %102 = vmatpush1.msra.mxu0 0.0
    %103 = vmatprep.subr.mxu0 0.0
    %104 = vmatpush1.msra.mxu0 0.0
    %105 = vmatprep.subr.mxu0 0.0
    %106 = vmatpush1.msra.mxu0 0.0
    %107 = vmatprep.subr.mxu0 0.0
    %108 = vmatpush1.msra.mxu0 0.0
    %109 = vmatprep.subr.mxu0 0.0
    %110 = vmatpush1.msra.mxu0 0.0
    %111 = vmatprep.subr.mxu0 0.0
    %112 = vmatpush1.msra.mxu0 0.0
    %113 = vmatprep.mubr.f32.mxu0 0.0
    %114 = vmatmul.mubr.f32.gmra.mrb[0].mxu0 %v47
    %v115 = vpop.f32.mrb[0].mxu0
    %v116 = vadd.f32 %v43, %v115
    %v117 = vpop.f32.mrb[0].mxu0
    %118 = vdwg.mxu0
    %v119 = vmax.f32 %v116, 0.0
    %v120 = vld [vmem:[%s3] sm:$0xff]
    %v121 = vld [vmem:[%s3 + $0x8] sm:$0xff]
    %v122 = vld [vmem:[%s3 + $0x10] sm:$0xff]
    %v123 = vld [vmem:[%s3 + $0x18] sm:$0xff]
    %v124 = vld [vmem:[%s3 + $0x20] sm:$0xff]
    %v125 = vld [vmem:[%s3 + $0x28] sm:$0xff]
    %v126 = vld [vmem:[%s3 + $0x30] sm:$0xff]
    %v127 = vld [vmem:[%s3 + $0x38] sm:$0xff]
    %v128 = vld [vmem:[%s4] sm:$0x1]
    %v130 = vlaneseq
    %v131 = vshrl.u32 %v130, 7
    %v132 = vsub.s32 0, %v131
    %v133 = vrot.slane %v128, %v132
    %vm135 = vcmask 523264
    %v137 = vsel %vm135, %v119, 0
    %139 = vmatprep.subr.mxu0 0.0
    %140 = vmatpush1.msra.mxu0 %v120
    %141 = vmatprep.subr.mxu0 0.0
    %142 = vmatpush1.msra.mxu0 %v121
    %143 = vmatprep.subr.mxu0 0.0
    %144 = vmatpush1.msra.mxu0 %v122
    %145 = vmatprep.subr.mxu0 0.0
    %146 = vmatpush1.msra.mxu0 %v123
    %147 = vmatprep.subr.mxu0 0.0
    %148 = vmatpush1.msra.mxu0 %v124
    %149 = vmatprep.subr.mxu0 0.0
    %150 = vmatpush1.msra.mxu0 %v125
    %151 = vmatprep.subr.mxu0 0.0
    %152 = vmatpush1.msra.mxu0 %v126
    %153 = vmatprep.subr.mxu0 0.0
    %154 = vmatpush1.msra.mxu0 %v127
    %155 = vmatprep.subr.mxu0 0.0
    %156 = vmatpush1.msra.mxu0 0.0
    %157 = vmatprep.subr.mxu0 0.0
    %158 = vmatpush1.msra.mxu0 0.0
    %159 = vmatprep.subr.mxu0 0.0
    %160 = vmatpush1.msra.mxu0 0.0
    %161 = vmatprep.subr.mxu0 0.0
    %162 = vmatpush1.msra.mxu0 0.0
    %163 = vmatprep.subr.mxu0 0.0
    %164 = vmatpush1.msra.mxu0 0.0
    %165 = vmatprep.subr.mxu0 0.0
    %166 = vmatpush1.msra.mxu0 0.0
    %167 = vmatprep.subr.mxu0 0.0
    %168 = vmatpush1.msra.mxu0 0.0
    %169 = vmatprep.subr.mxu0 0.0
    %170 = vmatpush1.msra.mxu0 0.0
    %171 = vmatprep.subr.mxu0 0.0
    %172 = vmatpush1.msra.mxu0 0.0
    %173 = vmatprep.subr.mxu0 0.0
    %174 = vmatpush1.msra.mxu0 0.0
    %175 = vmatprep.subr.mxu0 0.0
    %176 = vmatpush1.msra.mxu0 0.0
    %177 = vmatprep.subr.mxu0 0.0
    %178 = vmatpush1.msra.mxu0 0.0
    %179 = vmatprep.subr.mxu0 0.0
    %180 = vmatpush1.msra.mxu0 0.0
    %181 = vmatprep.subr.mxu0 0.0
    %182 = vmatpush1.msra.mxu0 0.0
    %183 = vmatprep.subr.mxu0 0.0
    %184 = vmatpush1.msra.mxu0 0.0
    %185 = vmatprep.subr.mxu0 0.0
    %186 = vmatpush1.msra.mxu0 0.0
    %187 = vmatprep.subr.mxu0 0.0
    %188 = vmatpush1.msra.mxu0 0.0
    %189 = vmatprep.subr.mxu0 0.0
    %190 = vmatpush1.msra.mxu0 0.0
    %191 = vmatprep.subr.mxu0 0.0
    %192 = vmatpush1.msra.mxu0 0.0
    %193 = vmatprep.subr.mxu0 0.0
    %194 = vmatpush1.msra.mxu0 0.0
    %195 = vmatprep.subr.mxu0 0.0
    %196 = vmatpush1.msra.mxu0 0.0
    %197 = vmatprep.subr.mxu0 0.0
    %198 = vmatpush1.msra.mxu0 0.0
    %199 = vmatprep.subr.mxu0 0.0
    %200 = vmatpush1.msra.mxu0 0.0
    %201 = vmatprep.subr.mxu0 0.0
    %202 = vmatpush1.msra.mxu0 0.0
    %203 = vmatprep.mubr.f32.mxu0 0.0
    %204 = vmatmul.mubr.f32.gmra.mrb[0].mxu0 %v137
    %v205 = vpop.f32.mrb[0].mxu0
    %v206 = vadd.f32 %v133, %v205
    %v207 = vpop.f32.mrb[0].mxu0
    %208 = vdwg.mxu0
    %v209 = vmax.f32 %v206, 0.0
    %v210 = vld [vmem:[%s5] sm:$0xff]
    %v211 = vld [vmem:[%s5 + $0x8] sm:$0xff]
    %v212 = vld [vmem:[%s5 + $0x10] sm:$0xff]
    %v213 = vld [vmem:[%s5 + $0x18] sm:$0xff]
    %v214 = vld [vmem:[%s5 + $0x20] sm:$0xff]
    %v215 = vld [vmem:[%s5 + $0x28] sm:$0xff]
    %v216 = vld [vmem:[%s5 + $0x30] sm:$0xff]
    %v217 = vld [vmem:[%s5 + $0x38] sm:$0xff]
    %v218 = vld [vmem:[%s6] sm:$0x1]
    %v220 = vlaneseq
    %v221 = vshrl.u32 %v220, 7
    %v222 = vsub.s32 0, %v221
    %v223 = vrot.slane %v218, %v222
    %v226 = vsel %vm135, %v209, 0
    %228 = vmatprep.subr.mxu0 0.0
    %229 = vmatpush1.msra.mxu0 %v210
    %230 = vmatprep.subr.mxu0 0.0
    %231 = vmatpush1.msra.mxu0 %v211
    %232 = vmatprep.subr.mxu0 0.0
    %233 = vmatpush1.msra.mxu0 %v212
    %234 = vmatprep.subr.mxu0 0.0
    %235 = vmatpush1.msra.mxu0 %v213
    %236 = vmatprep.subr.mxu0 0.0
    %237 = vmatpush1.msra.mxu0 %v214
    %238 = vmatprep.subr.mxu0 0.0
    %239 = vmatpush1.msra.mxu0 %v215
    %240 = vmatprep.subr.mxu0 0.0
    %241 = vmatpush1.msra.mxu0 %v216
    %242 = vmatprep.subr.mxu0 0.0
    %243 = vmatpush1.msra.mxu0 %v217
    %244 = vmatprep.subr.mxu0 0.0
    %245 = vmatpush1.msra.mxu0 0.0
    %246 = vmatprep.subr.mxu0 0.0
    %247 = vmatpush1.msra.mxu0 0.0
    %248 = vmatprep.subr.mxu0 0.0
    %249 = vmatpush1.msra.mxu0 0.0
    %250 = vmatprep.subr.mxu0 0.0
    %251 = vmatpush1.msra.mxu0 0.0
    %252 = vmatprep.subr.mxu0 0.0
    %253 = vmatpush1.msra.mxu0 0.0
    %254 = vmatprep.subr.mxu0 0.0
    %255 = vmatpush1.msra.mxu0 0.0
    %256 = vmatprep.subr.mxu0 0.0
    %257 = vmatpush1.msra.mxu0 0.0
    %258 = vmatprep.subr.mxu0 0.0
    %259 = vmatpush1.msra.mxu0 0.0
    %260 = vmatprep.subr.mxu0 0.0
    %261 = vmatpush1.msra.mxu0 0.0
    %262 = vmatprep.subr.mxu0 0.0
    %263 = vmatpush1.msra.mxu0 0.0
    %264 = vmatprep.subr.mxu0 0.0
    %265 = vmatpush1.msra.mxu0 0.0
    %266 = vmatprep.subr.mxu0 0.0
    %267 = vmatpush1.msra.mxu0 0.0
    %268 = vmatprep.subr.mxu0 0.0
    %269 = vmatpush1.msra.mxu0 0.0
    %270 = vmatprep.subr.mxu0 0.0
    %271 = vmatpush1.msra.mxu0 0.0
    %272 = vmatprep.subr.mxu0 0.0
    %273 = vmatpush1.msra.mxu0 0.0
    %274 = vmatprep.subr.mxu0 0.0
    %275 = vmatpush1.msra.mxu0 0.0
    %276 = vmatprep.subr.mxu0 0.0
    %277 = vmatpush1.msra.mxu0 0.0
    %278 = vmatprep.subr.mxu0 0.0
    %279 = vmatpush1.msra.mxu0 0.0
    %280 = vmatprep.subr.mxu0 0.0
    %281 = vmatpush1.msra.mxu0 0.0
    %282 = vmatprep.subr.mxu0 0.0
    %283 = vmatpush1.msra.mxu0 0.0
    %284 = vmatprep.subr.mxu0 0.0
    %285 = vmatpush1.msra.mxu0 0.0
    %286 = vmatprep.subr.mxu0 0.0
    %287 = vmatpush1.msra.mxu0 0.0
    %288 = vmatprep.subr.mxu0 0.0
    %289 = vmatpush1.msra.mxu0 0.0
    %290 = vmatprep.subr.mxu0 0.0
    %291 = vmatpush1.msra.mxu0 0.0
    %292 = vmatprep.mubr.f32.mxu0 0.0
    %293 = vmatmul.mubr.f32.gmra.mrb[0].mxu0 %v226
    %v294 = vpop.f32.mrb[0].mxu0
    %v295 = vadd.f32 %v223, %v294
    %v296 = vpop.f32.mrb[0].mxu0
    %297 = vdwg.mxu0
    %v298 = vmax.f32 %v295, 0.0
    %v299 = vld [vmem:[%s7] sm:$0xff]
    %v300 = vld [vmem:[%s7 + $0x8] sm:$0xff]
    %v301 = vld [vmem:[%s7 + $0x10] sm:$0xff]
    %v302 = vld [vmem:[%s7 + $0x18] sm:$0xff]
    %v303 = vld [vmem:[%s8] sm:$0x1]
    %v305 = vlaneseq
    %v306 = vshrl.u32 %v305, 7
    %v307 = vsub.s32 0, %v306
    %v308 = vrot.slane %v303, %v307
    %v311 = vsel %vm45, %v298, 0
    %313 = vmatprep.subr.mxu0 0.0
    %314 = vmatpush1.msra.mxu0 %v299
    %315 = vmatprep.subr.mxu0 0.0
    %316 = vmatpush1.msra.mxu0 %v300
    %317 = vmatprep.subr.mxu0 0.0
    %318 = vmatpush1.msra.mxu0 %v301
    %319 = vmatprep.subr.mxu0 0.0
    %320 = vmatpush1.msra.mxu0 %v302
    %321 = vmatprep.subr.mxu0 0.0
    %322 = vmatpush1.msra.mxu0 0.0
    %323 = vmatprep.subr.mxu0 0.0
    %324 = vmatpush1.msra.mxu0 0.0
    %325 = vmatprep.subr.mxu0 0.0
    %326 = vmatpush1.msra.mxu0 0.0
    %327 = vmatprep.subr.mxu0 0.0
    %328 = vmatpush1.msra.mxu0 0.0
    %329 = vmatprep.subr.mxu0 0.0
    %330 = vmatpush1.msra.mxu0 0.0
    %331 = vmatprep.subr.mxu0 0.0
    %332 = vmatpush1.msra.mxu0 0.0
    %333 = vmatprep.subr.mxu0 0.0
    %334 = vmatpush1.msra.mxu0 0.0
    %335 = vmatprep.subr.mxu0 0.0
    %336 = vmatpush1.msra.mxu0 0.0
    %337 = vmatprep.subr.mxu0 0.0
    %338 = vmatpush1.msra.mxu0 0.0
    %339 = vmatprep.subr.mxu0 0.0
    %340 = vmatpush1.msra.mxu0 0.0
    %341 = vmatprep.subr.mxu0 0.0
    %342 = vmatpush1.msra.mxu0 0.0
    %343 = vmatprep.subr.mxu0 0.0
    %344 = vmatpush1.msra.mxu0 0.0
    %345 = vmatprep.subr.mxu0 0.0
    %346 = vmatpush1.msra.mxu0 0.0
    %347 = vmatprep.subr.mxu0 0.0
    %348 = vmatpush1.msra.mxu0 0.0
    %349 = vmatprep.subr.mxu0 0.0
    %350 = vmatpush1.msra.mxu0 0.0
    %351 = vmatprep.subr.mxu0 0.0
    %352 = vmatpush1.msra.mxu0 0.0
    %353 = vmatprep.subr.mxu0 0.0
    %354 = vmatpush1.msra.mxu0 0.0
    %355 = vmatprep.subr.mxu0 0.0
    %356 = vmatpush1.msra.mxu0 0.0
    %357 = vmatprep.subr.mxu0 0.0
    %358 = vmatpush1.msra.mxu0 0.0
    %359 = vmatprep.subr.mxu0 0.0
    %360 = vmatpush1.msra.mxu0 0.0
    %361 = vmatprep.subr.mxu0 0.0
    %362 = vmatpush1.msra.mxu0 0.0
    %363 = vmatprep.subr.mxu0 0.0
    %364 = vmatpush1.msra.mxu0 0.0
    %365 = vmatprep.subr.mxu0 0.0
    %366 = vmatpush1.msra.mxu0 0.0
    %367 = vmatprep.subr.mxu0 0.0
    %368 = vmatpush1.msra.mxu0 0.0
    %369 = vmatprep.subr.mxu0 0.0
    %370 = vmatpush1.msra.mxu0 0.0
    %371 = vmatprep.subr.mxu0 0.0
    %372 = vmatpush1.msra.mxu0 0.0
    %373 = vmatprep.subr.mxu0 0.0
    %374 = vmatpush1.msra.mxu0 0.0
    %375 = vmatprep.subr.mxu0 0.0
    %376 = vmatpush1.msra.mxu0 0.0
    %377 = vmatprep.mubr.f32.mxu0 0.0
    %378 = vmatmul.mubr.f32.gmra.mrb[0].mxu0 %v311
    %v379 = vpop.f32.mrb[0].mxu0
    %v380 = vadd.f32 %v308, %v379
    %v381 = vpop.f32.mrb[0].mxu0
    %382 = vdwg.mxu0
    %v383 = vsub.f32 0.0, %v380
    %v384 = vmul.f32 %v383, 1.442695
    %v385 = vpow.pop %v384
    %v386 = vadd.f32 %v385, 1.0
    %v387 = vrcp.pop %v386
    %vm388 = vcmask 130048
    %389 = vst.msk [vmem:[#allocation2] sm:$0xff] %vm388, %v387
    // Predicated region
    $region38: #{mlp_forward.1} parent=1 // pred_check
      _
    $region39: #{mlp_forward.1} parent=1 // pred_check_branch
      %391 = sbr.rel (0) target = $region41
    $region40: #{mlp_forward.1} parent=1 // pred_region
      %s393 = ssub.s32 128, 128
      %394 = vsyncadd [#allocation3], %s393
      %s396 = sshll.u32 [#allocation2], 4
      %s397 = int_to_ptr.vmem [resolvable:$true] %s396
      %399 = dma.vmem_to_hbm [thread:$0]  %s397, 128, %s9, [#allocation3]
    $region41: #{mlp_forward.1} parent=1 // pred_fallthru
      _
    // Predicated region
    $region42: #{mlp_forward.1} parent=1 // pred_check
      _
    $region43: #{mlp_forward.1} parent=1 // pred_check_branch
      %401 = sbr.rel (0) target = $region45
    $region44: #{mlp_forward.1} parent=1 // pred_region
      %402 = dma.done [#allocation3], 128
    $region45: #{mlp_forward.1} parent=1 // pred_fallthru
      _
    %403 = vsyncpa [#allocation3], 1

</llo_original>
